<compile_context>
chip_gen: v7x
topology: tpu7x:2x2x1
jax: 0.10.0
libtpu: 0.0.40
codegen_flags: <defaults>
</compile_context>

<pallas_src>
import jax
import jax.numpy as jnp
from jax import lax
from jax.experimental import pallas as pl
from jax.experimental.pallas import tpu as pltpu


def _round_up(n, m):
    return ((n + m - 1) // m) * m


def _default_tile_cap():
    """Generation-aware batch-tile cap.

    The streamed input block is (tb, 20) f32, lane-padded 20->128, i.e.
    tb*512 B per buffer and tb*1024 B double-buffered.  Keep that under ~1/8
    of physical VMEM: 128 MiB (v5e/v6e) -> 16384, 64 MiB (v7x) -> 8192.
    """
    try:
        vmem_bytes = pltpu.get_tpu_info().vmem_capacity_bytes
    except Exception:  # conservative fallback (assume v7x-sized VMEM)
        vmem_bytes = 64 << 20
    cap = (vmem_bytes // 8) // 1024
    cap = (cap // 128) * 128
    return max(128, min(16384, cap))


def _choose_tile(batch, tile_cap):
    """Pick the batch tile size.

    Single-tile (block == full array) for tiny batches; otherwise >=2 tiles
    (so the "parallel" grid axis feeds both v7x TensorCores), each a multiple
    of 128 (lane-dense output blocks, legal (8,128) tiling), sized to minimize
    padding waste while staying under the VMEM-derived cap.
    """
    bmin = _round_up(batch, 8)
    if bmin <= 256:
        return bmin
    num_tiles = max(2, pl.cdiv(bmin, tile_cap))
    return _round_up(pl.cdiv(bmin, num_tiles), 128)


def _mlp_kernel(x_ref, w0_ref, b0_ref, w1_ref, b1_ref, w2_ref, b2_ref, o_ref):
    x = x_ref[...]                                     # (TILE_B, 20) f32

    # Hoisted (single) reads of the resident weights / biases.
    w0 = w0_ref[...]                                   # (num_units, 20)
    b0 = b0_ref[...]                                   # (num_units, 1)
    w1 = w1_ref[...]                                   # (10, num_units)
    b1 = b1_ref[...]                                   # (10, 1)
    w2 = w2_ref[...]                                   # (1, 10)
    b2 = b2_ref[...]                                   # (1, 1)

    # dense0 + relu, feature-major: (num_units, 20) . (TILE_B, 20)^T
    #   -> (num_units, TILE_B).  Batch stays on lanes; bias broadcasts
    #   across lanes so the VPU only touches ~16 padded sublanes.
    h0 = lax.dot_general(
        w0, x,
        dimension_numbers=(((1,), (1,)), ((), ())),
        preferred_element_type=jnp.float32)
    h0 = jnp.maximum(h0 + b0, 0.0)                     # (num_units, TILE_B)

    # dropout(0.5): identity in eval mode (see TODO above)

    # dense1 + relu: (10, num_units) . (num_units, TILE_B) -> (10, TILE_B)
    h1 = jnp.dot(w1, h0, preferred_element_type=jnp.float32)
    h1 = jnp.maximum(h1 + b1, 0.0)                     # (10, TILE_B)

    # output layer 10 -> 1: (1, 10) . (10, TILE_B) -> lane-dense (1, TILE_B)
    out = jnp.dot(w2, h1, preferred_element_type=jnp.float32)
    o_ref[...] = out + b2                              # (1, TILE_B)


def my_binary_classifier_forward(x, params, tile_cap=None, min_pallas_batch=1024):
    """x: (B, 20) float32. Returns (B,) float32 (squeeze of the (B, 1) logits)."""
    w0, b0, w1, b1, w2, b2 = params
    B, F = x.shape
    assert F == 20, F

    # Small-batch bypass: fixed pallas_call overhead dominates tiny batches.
    if B < min_pallas_batch:
        return _reference_forward(x, params)

    if tile_cap is None:
        tile_cap = _default_tile_cap()
    assert tile_cap % 128 == 0 and tile_cap >= 128, tile_cap

    tb = _choose_tile(B, tile_cap)
    Bp = _round_up(B, tb)
    if Bp != B:
        x = jnp.pad(x, ((0, Bp - B), (0, 0)))
    num_tiles = Bp // tb

    # Weights/biases: whole array per block, constant block index -> resident
    # in VMEM; only the (tb, 20) input and (1, tb) output stream each step.
    resident = lambda a: pl.BlockSpec(a.shape, lambda i, _nd=a.ndim: (0,) * _nd)

    # Advisory cost (per padded batch): 2*(20*nu + nu*10 + 10*1) flops/row,
    # ~84 bytes/row of HBM traffic, no transcendentals.
    nu = w0.shape[0]
    cost = pl.CostEstimate(
        flops=2 * (20 * nu + nu * 10 + 10) * Bp,
        transcendentals=0,
        bytes_accessed=84 * Bp)

    out = pl.pallas_call(
        _mlp_kernel,
        out_shape=jax.ShapeDtypeStruct((1, Bp), jnp.float32),
        grid=(num_tiles,),
        in_specs=[
            pl.BlockSpec((tb, 20), lambda i: (i, 0)),        # x: batch-tiled
            resident(w0), resident(b0),
            resident(w1), resident(b1),
            resident(w2), resident(b2),
        ],
        out_specs=pl.BlockSpec((1, tb), lambda i: (0, i)),   # lane-dense row
        compiler_params=pltpu.CompilerParams(
            dimension_semantics=("parallel",),
            vmem_limit_bytes=32 * 1024 * 1024),
        cost_estimate=cost,
    )(x, w0, b0, w1, b1, w2, b2)

    # squeeze_(-1) from the PyTorch forward + drop batch padding.
    return out.reshape(Bp)[:B]


def init_params(key, num_units=10):
    """Deterministic parameter init matching the PyTorch module's shapes.

    All weights stored PyTorch-style (out, in) to feed the feature-major
    matmuls directly; biases stored as (out, 1) columns so they broadcast
    across the lane (batch) dimension in-kernel.
    """
    k0, k1, k2, k3, k4, k5 = jax.random.split(key, 6)
    scale = 0.1
    w0 = scale * jax.random.normal(k0, (num_units, 20), jnp.float32)
    b0 = scale * jax.random.normal(k1, (num_units, 1), jnp.float32)
    w1 = scale * jax.random.normal(k2, (10, num_units), jnp.float32)
    b1 = scale * jax.random.normal(k3, (10, 1), jnp.float32)
    w2 = scale * jax.random.normal(k4, (1, 10), jnp.float32)
    b2 = scale * jax.random.normal(k5, (1, 1), jnp.float32)
    return (w0, b0, w1, b1, w2, b2)


def _reference_forward(x, params):
    """Pure-JAX reference (eval-mode dropout); also the small-batch path."""
    w0, b0, w1, b1, w2, b2 = params
    h0 = jnp.maximum(x @ w0.T + b0.T, 0.0)
    h1 = jnp.maximum(h0 @ w1.T + b1.T, 0.0)
    return (h1 @ w2.T + b2.T).reshape(x.shape[0])


if __name__ == "__main__":
    key = jax.random.PRNGKey(0)
    kx, kp, kx2 = jax.random.split(key, 3)

    params = init_params(kp, num_units=10)

    # Small demo batch: single tile (block == full array); force the Pallas
    # path so the kernel is exercised despite the small-batch bypass.
    B = 8
    x = jax.random.normal(kx, (B, 20), jnp.float32)
    y = jax.block_until_ready(
        my_binary_classifier_forward(x, params, min_pallas_batch=0))
    y_ref = _reference_forward(x, params)
    assert y.shape == (B,), y.shape
    assert jnp.allclose(y, y_ref, atol=1e-5, rtol=1e-5), (y, y_ref)

    # Larger, non-multiple batch: exercises the multi-tile grid (2 tiles of
    # 256 rows), batch padding, and the megacore-friendly parallel axis.
    B2 = 300
    x2 = jax.random.normal(kx2, (B2, 20), jnp.float32)
    y2 = jax.block_until_ready(
        my_binary_classifier_forward(x2, params, min_pallas_batch=0))
    y2_ref = _reference_forward(x2, params)
    assert y2.shape == (B2,), y2.shape
    assert jnp.allclose(y2, y2_ref, atol=1e-4, rtol=1e-4), (y2, y2_ref)

    print("KERNEL_OK")
</pallas_src>

<mosaic_0001>
module attributes {stable_mosaic.version = 11 : i64} {
  func.func @_mlp_kernel(%arg0: i32, %arg1: memref<8x20xf32, #tpu.memory_space<vmem>>, %arg2: memref<10x20xf32, #tpu.memory_space<vmem>>, %arg3: memref<10x1xf32, #tpu.memory_space<vmem>>, %arg4: memref<10x10xf32, #tpu.memory_space<vmem>>, %arg5: memref<10x1xf32, #tpu.memory_space<vmem>>, %arg6: memref<1x10xf32, #tpu.memory_space<vmem>>, %arg7: memref<1x1xf32, #tpu.memory_space<vmem>>, %arg8: memref<1x8xf32, #tpu.memory_space<vmem>>) attributes {dimension_semantics = [#tpu.dimension_semantics<parallel>], iteration_bounds = array<i64: 1>, scalar_prefetch = 0 : i64, scratch_operands = 0 : i64, tpu.core_type = #tpu.core_type<tc>, window_params = [{transform_indices = @transform_0, window_bounds = array<i64: 8, 20>}, {pipeline_mode = #tpu.pipeline_mode<synchronous>, transform_indices = @transform_1, window_bounds = array<i64: 10, 20>}, {pipeline_mode = #tpu.pipeline_mode<synchronous>, transform_indices = @transform_2, window_bounds = array<i64: 10, 1>}, {pipeline_mode = #tpu.pipeline_mode<synchronous>, transform_indices = @transform_3, window_bounds = array<i64: 10, 10>}, {pipeline_mode = #tpu.pipeline_mode<synchronous>, transform_indices = @transform_4, window_bounds = array<i64: 10, 1>}, {pipeline_mode = #tpu.pipeline_mode<synchronous>, transform_indices = @transform_5, window_bounds = array<i64: 1, 10>}, {pipeline_mode = #tpu.pipeline_mode<synchronous>, transform_indices = @transform_6, window_bounds = array<i64: 1, 1>}, {transform_indices = @transform_7, window_bounds = array<i64: 1, 8>}]} {
    %c0 = arith.constant 0 : index
    %c0_0 = arith.constant 0 : index
    %0 = vector.load %arg1[%c0, %c0_0] : memref<8x20xf32, #tpu.memory_space<vmem>>, vector<8x20xf32>
    %c0_1 = arith.constant 0 : index
    %c0_2 = arith.constant 0 : index
    %1 = vector.load %arg2[%c0_1, %c0_2] : memref<10x20xf32, #tpu.memory_space<vmem>>, vector<10x20xf32>
    %c0_3 = arith.constant 0 : index
    %c0_4 = arith.constant 0 : index
    %2 = vector.load %arg3[%c0_3, %c0_4] : memref<10x1xf32, #tpu.memory_space<vmem>>, vector<10x1xf32>
    %c0_5 = arith.constant 0 : index
    %c0_6 = arith.constant 0 : index
    %3 = vector.load %arg4[%c0_5, %c0_6] : memref<10x10xf32, #tpu.memory_space<vmem>>, vector<10x10xf32>
    %c0_7 = arith.constant 0 : index
    %c0_8 = arith.constant 0 : index
    %4 = vector.load %arg5[%c0_7, %c0_8] : memref<10x1xf32, #tpu.memory_space<vmem>>, vector<10x1xf32>
    %c0_9 = arith.constant 0 : index
    %c0_10 = arith.constant 0 : index
    %5 = vector.load %arg6[%c0_9, %c0_10] : memref<1x10xf32, #tpu.memory_space<vmem>>, vector<1x10xf32>
    %c0_11 = arith.constant 0 : index
    %c0_12 = arith.constant 0 : index
    %6 = vector.load %arg7[%c0_11, %c0_12] : memref<1x1xf32, #tpu.memory_space<vmem>>, vector<1x1xf32>
    %cst = arith.constant dense<0.000000e+00> : vector<10x8xf32>
    %7 = tpu.matmul %1, %0, %cst {dimension_numbers = #tpu.dot_dimension_numbers<[1], [1], [0], [0], [0, 0, 1, 0], [], []>} : vector<10x20xf32>, vector<8x20xf32>, vector<10x8xf32> -> vector<10x8xf32>
    %8 = vector.broadcast %2 : vector<10x1xf32> to vector<10x8xf32>
    %9 = arith.addf %7, %8 : vector<10x8xf32>
    %cst_13 = arith.constant 0.000000e+00 : f32
    %10 = vector.broadcast %cst_13 : f32 to vector<10x8xf32>
    %11 = arith.maximumf %9, %10 : vector<10x8xf32>
    %cst_14 = arith.constant dense<0.000000e+00> : vector<10x8xf32>
    %12 = tpu.matmul %3, %11, %cst_14 {dimension_numbers = #tpu.dot_dimension_numbers<[1], [0], [0], [1], [0, 0, 1, 1], [], []>} : vector<10x10xf32>, vector<10x8xf32>, vector<10x8xf32> -> vector<10x8xf32>
    %13 = vector.broadcast %4 : vector<10x1xf32> to vector<10x8xf32>
    %14 = arith.addf %12, %13 : vector<10x8xf32>
    %cst_15 = arith.constant 0.000000e+00 : f32
    %15 = vector.broadcast %cst_15 : f32 to vector<10x8xf32>
    %16 = arith.maximumf %14, %15 : vector<10x8xf32>
    %cst_16 = arith.constant dense<0.000000e+00> : vector<1x8xf32>
    %17 = tpu.matmul %5, %16, %cst_16 {dimension_numbers = #tpu.dot_dimension_numbers<[1], [0], [0], [1], [0, 0, 1, 1], [], []>} : vector<1x10xf32>, vector<10x8xf32>, vector<1x8xf32> -> vector<1x8xf32>
    %18 = vector.broadcast %6 : vector<1x1xf32> to vector<1x8xf32>
    %19 = arith.addf %17, %18 : vector<1x8xf32>
    %c0_17 = arith.constant 0 : index
    %c0_18 = arith.constant 0 : index
    %20 = vector.load %arg8[%c0_17, %c0_18] : memref<1x8xf32, #tpu.memory_space<vmem>>, vector<1x8xf32>
    tpu.vector_store %arg8[%c0_17, %c0_18], %19 {strides = array<i32>} : memref<1x8xf32, #tpu.memory_space<vmem>>, vector<1x8xf32>,
    return
  }
  func.func @transform_0(%arg0: i32) -> (i32, i32) {
    %c0_i32 = arith.constant 0 : i32
    %c0_i32_0 = arith.constant 0 : i32
    return %arg0, %c0_i32 : i32, i32
  }
  func.func @transform_1(%arg0: i32) -> (i32, i32) {
    %c0_i32 = arith.constant 0 : i32
    %c0_i32_0 = arith.constant 0 : i32
    %c0_i32_1 = arith.constant 0 : i32
    return %c0_i32, %c0_i32_0 : i32, i32
  }
  func.func @transform_2(%arg0: i32) -> (i32, i32) {
    %c0_i32 = arith.constant 0 : i32
    %c0_i32_0 = arith.constant 0 : i32
    %c0_i32_1 = arith.constant 0 : i32
    return %c0_i32, %c0_i32_0 : i32, i32
  }
  func.func @transform_3(%arg0: i32) -> (i32, i32) {
    %c0_i32 = arith.constant 0 : i32
    %c0_i32_0 = arith.constant 0 : i32
    %c0_i32_1 = arith.constant 0 : i32
    return %c0_i32, %c0_i32_0 : i32, i32
  }
  func.func @transform_4(%arg0: i32) -> (i32, i32) {
    %c0_i32 = arith.constant 0 : i32
    %c0_i32_0 = arith.constant 0 : i32
    %c0_i32_1 = arith.constant 0 : i32
    return %c0_i32, %c0_i32_0 : i32, i32
  }
  func.func @transform_5(%arg0: i32) -> (i32, i32) {
    %c0_i32 = arith.constant 0 : i32
    %c0_i32_0 = arith.constant 0 : i32
    %c0_i32_1 = arith.constant 0 : i32
    return %c0_i32, %c0_i32_0 : i32, i32
  }
  func.func @transform_6(%arg0: i32) -> (i32, i32) {
    %c0_i32 = arith.constant 0 : i32
    %c0_i32_0 = arith.constant 0 : i32
    %c0_i32_1 = arith.constant 0 : i32
    return %c0_i32, %c0_i32_0 : i32, i32
  }
  func.func @transform_7(%arg0: i32) -> (i32, i32) {
    %c0_i32 = arith.constant 0 : i32
    %c0_i32_0 = arith.constant 0 : i32
    return %c0_i32, %arg0 : i32, i32
  }
}

</mosaic_0001>

<llo_original>
// kernel: tpu_custom_call.1
$region0: #{tpu_custom_call.1}
  #allocation0 [shape = 'u32[]', space=smem, size = 0x4, offset = 0x4, fixed_abs, tag = 'smem constant byte address 0x4 - core index']
  #allocation1 [shape = 'u32[144,128]{1,0:T(1,128)}', space=vmem, size = 0x12000, scoped, tag = 'internal scratch']
  #allocation2 [shape = 'f32[1,1]{1,0:T(1,128)S(1)}', space=vmem, size = 0x200, scoped, tag = 'scoped memory for tpu_custom_call.1']
  %s0 = inlined_call_operand.hbm [shape: f32[8,20], index: 0, kind: input, shape index: {}]
  %s1 = inlined_call_operand.vmem [shape: f32[10,20], index: 1, kind: input, shape index: {}]
  %s2 = inlined_call_operand.vmem [shape: f32[10,1], index: 2, kind: input, shape index: {}]
  %s3 = inlined_call_operand.vmem [shape: f32[10,10], index: 3, kind: input, shape index: {}]
  %s4 = inlined_call_operand.vmem [shape: f32[10,1], index: 4, kind: input, shape index: {}]
  %s5 = inlined_call_operand.vmem [shape: f32[1,10], index: 5, kind: input, shape index: {}]
  %s6 = inlined_call_operand.<no memory space> [shape: f32[1,1], index: 6, kind: input, shape index: {}]
  %s7 = inlined_call_operand.hbm [shape: f32[1,8], index: 7, kind: output, shape index: {}]
  %s8 = sld [smem:[#allocation0]]
  $region42: #{tpu_custom_call.1} parent=0
    _
  %s10 = ssub.s32 1, %s8
  %s11 = scalar_select 0, %s10, %s8
  %v12 = vstv %s6
  %13 = vst [vmem:[#allocation2] sm:$0x1] %v12
  $region1: #{tpu_custom_call.1} parent=0
    #allocation3 [shape = 'u8[4096]{0}', space=vmem, size = 0x1000, scoped, tag = 'input window, operand 0, single buffered']
    #allocation4 [shape = 's32[1]{0}', space=sflag, size = 0x4, scoped, tag = 'scoped memory for tpu_custom_call.1']
    #allocation5 [shape = 's32[1]{0}', space=sflag, size = 0x4, scoped, tag = 'scoped memory for tpu_custom_call.1']
    #allocation6 [shape = 'u8[512]{0}', space=vmem, size = 0x400, scoped, tag = 'output window, operand 0, single buffered']
    %14 = vsyncpa [#allocation4], 0
    %15 = vsyncpa [#allocation5], 0
    // Predicated region
    $region2: #{tpu_custom_call.1} parent=1 // pred_check
      _
    $region3: #{tpu_custom_call.1} parent=1 // pred_check_branch
      %17 = sbr.rel (0) target = $region5
    $region4: #{tpu_custom_call.1} parent=1 // pred_region
      %s19 = ssub.s32 128, 128
      %20 = vsyncadd [#allocation4], %s19
      %s22 = sshll.u32 [#allocation3], 4
      %s23 = int_to_ptr.vmem [resolvable:$true] %s22
      %25 = dma.hbm_to_vmem [thread:$0]  %s0, 128, %s23, [#allocation4]
    $region5: #{tpu_custom_call.1} parent=1 // pred_fallthru
      _
    // Predicated region
    $region6: #{tpu_custom_call.1} parent=1 // pred_check
      _
    $region7: #{tpu_custom_call.1} parent=1 // pred_check_branch
      %27 = sbr.rel (0) target = $region9
    $region8: #{tpu_custom_call.1} parent=1 // pred_region
      _
    $region9: #{tpu_custom_call.1} parent=1 // pred_fallthru
      _
    // Predicated region
    $region10: #{tpu_custom_call.1} parent=1 // pred_check
      _
    $region11: #{tpu_custom_call.1} parent=1 // pred_check_branch
      %29 = sbr.rel (0) target = $region13
    $region12: #{tpu_custom_call.1} parent=1 // pred_region
      _
    $region13: #{tpu_custom_call.1} parent=1 // pred_fallthru
      _
    // Predicated region
    $region14: #{tpu_custom_call.1} parent=1 // pred_check
      _
    $region15: #{tpu_custom_call.1} parent=1 // pred_check_branch
      %31 = sbr.rel (0) target = $region17
    $region16: #{tpu_custom_call.1} parent=1 // pred_region
      _
    $region17: #{tpu_custom_call.1} parent=1 // pred_fallthru
      _
    // Predicated region
    $region18: #{tpu_custom_call.1} parent=1 // pred_check
      _
    $region19: #{tpu_custom_call.1} parent=1 // pred_check_branch
      %33 = sbr.rel (0) target = $region21
    $region20: #{tpu_custom_call.1} parent=1 // pred_region
      _
    $region21: #{tpu_custom_call.1} parent=1 // pred_fallthru
      _
    // Predicated region
    $region22: #{tpu_custom_call.1} parent=1 // pred_check
      _
    $region23: #{tpu_custom_call.1} parent=1 // pred_check_branch
      %35 = sbr.rel (0) target = $region25
    $region24: #{tpu_custom_call.1} parent=1 // pred_region
      _
    $region25: #{tpu_custom_call.1} parent=1 // pred_fallthru
      _
    // Predicated region
    $region26: #{tpu_custom_call.1} parent=1 // pred_check
      _
    $region27: #{tpu_custom_call.1} parent=1 // pred_check_branch
      %37 = sbr.rel (0) target = $region29
    $region28: #{tpu_custom_call.1} parent=1 // pred_region
      _
    $region29: #{tpu_custom_call.1} parent=1 // pred_fallthru
      _
    // Predicated region
    $region30: #{tpu_custom_call.1} parent=1 // pred_check
      _
    $region31: #{tpu_custom_call.1} parent=1 // pred_check_branch
      %39 = sbr.rel (0) target = $region33
    $region32: #{tpu_custom_call.1} parent=1 // pred_region
      %40 = dma.done [#allocation4], 128
    $region33: #{tpu_custom_call.1} parent=1 // pred_fallthru
      _
    %v41 = vld [vmem:[#allocation3] sm:$0xff]
    %v42 = vld [vmem:[%s1] sm:$0xff]
    %v43 = vld [vmem:[%s1 + $0x8] sm:$0x3]
    %v44 = vld [vmem:[%s2] sm:$0xff]
    %v45 = vld [vmem:[%s2 + $0x8] sm:$0x3]
    %v46 = vld [vmem:[%s3] sm:$0xff]
    %v47 = vld [vmem:[%s3 + $0x8] sm:$0x3]
    %v48 = vld [vmem:[%s4] sm:$0xff]
    %v49 = vld [vmem:[%s4 + $0x8] sm:$0x3]
    %v50 = vld [vmem:[%s5] sm:$0x1]
    %v51 = vld [vmem:[#allocation2] sm:$0x1]
    %53 = vset.pattern.permute.xlu0 0
    %54 = vperm.xlu0 %53, %v44
    %v55 = vpop.permute.xlu0 %54
    %58 = vset.pattern.permute.xlu0 0
    %59 = vperm.xlu0 %58, %v45
    %v60 = vpop.permute.xlu0 %59
    %vm62 = vcmask 162816
    %v64 = vsel %vm62, %v42, 0
    %v67 = vsel %vm62, %v43, 0
    %v70 = vsel %vm62, %v41, 0
    %72 = vmatprep.subr.mxu0 0.0
    %73 = vmatpush1.xpose.msra.mxu0 %v70
    %74 = vmatprep.subr.mxu0 0.0
    %75 = vmatpush1.xpose.msra.mxu0 0.0
    %76 = vmatprep.subr.mxu0 0.0
    %77 = vmatpush1.xpose.msra.mxu0 0.0
    %78 = vmatprep.subr.mxu0 0.0
    %79 = vmatpush1.xpose.msra.mxu0 0.0
    %80 = vmatprep.subr.mxu0 0.0
    %81 = vmatpush1.xpose.msra.mxu0 0.0
    %82 = vmatprep.subr.mxu0 0.0
    %83 = vmatpush1.xpose.msra.mxu0 0.0
    %84 = vmatprep.subr.mxu0 0.0
    %85 = vmatpush1.xpose.msra.mxu0 0.0
    %86 = vmatprep.subr.mxu0 0.0
    %87 = vmatpush1.xpose.msra.mxu0 0.0
    %88 = vmatprep.subr.mxu0 0.0
    %89 = vmatpush1.xpose.msra.mxu0 0.0
    %90 = vmatprep.subr.mxu0 0.0
    %91 = vmatpush1.xpose.msra.mxu0 0.0
    %92 = vmatprep.subr.mxu0 0.0
    %93 = vmatpush1.xpose.msra.mxu0 0.0
    %94 = vmatprep.subr.mxu0 0.0
    %95 = vmatpush1.xpose.msra.mxu0 0.0
    %96 = vmatprep.subr.mxu0 0.0
    %97 = vmatpush1.xpose.msra.mxu0 0.0
    %98 = vmatprep.subr.mxu0 0.0
    %99 = vmatpush1.xpose.msra.mxu0 0.0
    %100 = vmatprep.subr.mxu0 0.0
    %101 = vmatpush1.xpose.msra.mxu0 0.0
    %102 = vmatprep.subr.mxu0 0.0
    %103 = vmatpush1.xpose.msra.mxu0 0.0
    %104 = vmatprep.subr.mxu0 0.0
    %105 = vmatpush1.xpose.msra.mxu0 0.0
    %106 = vmatprep.subr.mxu0 0.0
    %107 = vmatpush1.xpose.msra.mxu0 0.0
    %108 = vmatprep.subr.mxu0 0.0
    %109 = vmatpush1.xpose.msra.mxu0 0.0
    %110 = vmatprep.subr.mxu0 0.0
    %111 = vmatpush1.xpose.msra.mxu0 0.0
    %112 = vmatprep.subr.mxu0 0.0
    %113 = vmatpush1.xpose.msra.mxu0 0.0
    %114 = vmatprep.subr.mxu0 0.0
    %115 = vmatpush1.xpose.msra.mxu0 0.0
    %116 = vmatprep.subr.mxu0 0.0
    %117 = vmatpush1.xpose.msra.mxu0 0.0
    %118 = vmatprep.subr.mxu0 0.0
    %119 = vmatpush1.xpose.msra.mxu0 0.0
    %120 = vmatprep.subr.mxu0 0.0
    %121 = vmatpush1.xpose.msra.mxu0 0.0
    %122 = vmatprep.subr.mxu0 0.0
    %123 = vmatpush1.xpose.msra.mxu0 0.0
    %124 = vmatprep.subr.mxu0 0.0
    %125 = vmatpush1.xpose.msra.mxu0 0.0
    %126 = vmatprep.subr.mxu0 0.0
    %127 = vmatpush1.xpose.msra.mxu0 0.0
    %128 = vmatprep.subr.mxu0 0.0
    %129 = vmatpush1.xpose.msra.mxu0 0.0
    %130 = vmatprep.subr.mxu0 0.0
    %131 = vmatpush1.xpose.msra.mxu0 0.0
    %132 = vmatprep.subr.mxu0 0.0
    %133 = vmatpush1.xpose.msra.mxu0 0.0
    %134 = vmatprep.subr.mxu0 0.0
    %135 = vmatpush1.xpose.msra.mxu0 0.0
    %136 = vmatprep.mubr.f32.mxu0 0.0
    %137 = vmatmul.mubr.f32.gmra.mrb[0].mxu0 %v64
    %v138 = vpop.f32.mrb[0].mxu0
    %v139 = vadd.f32 %v55, %v138
    %v140 = vpop.f32.mrb[0].mxu0
    %141 = vmatprep.mubr.f32.mxu0 0.0
    %142 = vmatmul.mubr.f32.gmra.mrb[0].mxu0 %v67
    %v143 = vpop.f32.mrb[0].mxu0
    %v144 = vadd.f32 %v60, %v143
    %v145 = vpop.f32.mrb[0].mxu0
    %146 = vdwg.mxu0
    %v147 = vmax.f32 %v139, 0.0
    %v148 = vmax.f32 %v144, 0.0
    %150 = vset.pattern.permute.xlu0 0
    %151 = vperm.xlu0 %150, %v48
    %v152 = vpop.permute.xlu0 %151
    %155 = vset.pattern.permute.xlu0 0
    %156 = vperm.xlu0 %155, %v49
    %v157 = vpop.permute.xlu0 %156
    %vm159 = vcmask 80896
    %v161 = vsel %vm159, %v46, 0
    %v164 = vsel %vm159, %v47, 0
    %vm166 = vcmask 1041408
    %v168 = vsel %vm166, %v148, 0
    %170 = vmatprep.subr.mxu0 0.0
    %171 = vmatpush1.msra.mxu0 %v147
    %172 = vmatprep.subr.mxu0 0.0
    %173 = vmatpush1.msra.mxu0 %v168
    %174 = vmatprep.subr.mxu0 0.0
    %175 = vmatpush1.msra.mxu0 0.0
    %176 = vmatprep.subr.mxu0 0.0
    %177 = vmatpush1.msra.mxu0 0.0
    %178 = vmatprep.subr.mxu0 0.0
    %179 = vmatpush1.msra.mxu0 0.0
    %180 = vmatprep.subr.mxu0 0.0
    %181 = vmatpush1.msra.mxu0 0.0
    %182 = vmatprep.subr.mxu0 0.0
    %183 = vmatpush1.msra.mxu0 0.0
    %184 = vmatprep.subr.mxu0 0.0
    %185 = vmatpush1.msra.mxu0 0.0
    %186 = vmatprep.subr.mxu0 0.0
    %187 = vmatpush1.msra.mxu0 0.0
    %188 = vmatprep.subr.mxu0 0.0
    %189 = vmatpush1.msra.mxu0 0.0
    %190 = vmatprep.subr.mxu0 0.0
    %191 = vmatpush1.msra.mxu0 0.0
    %192 = vmatprep.subr.mxu0 0.0
    %193 = vmatpush1.msra.mxu0 0.0
    %194 = vmatprep.subr.mxu0 0.0
    %195 = vmatpush1.msra.mxu0 0.0
    %196 = vmatprep.subr.mxu0 0.0
    %197 = vmatpush1.msra.mxu0 0.0
    %198 = vmatprep.subr.mxu0 0.0
    %199 = vmatpush1.msra.mxu0 0.0
    %200 = vmatprep.subr.mxu0 0.0
    %201 = vmatpush1.msra.mxu0 0.0
    %202 = vmatprep.subr.mxu0 0.0
    %203 = vmatpush1.msra.mxu0 0.0
    %204 = vmatprep.subr.mxu0 0.0
    %205 = vmatpush1.msra.mxu0 0.0
    %206 = vmatprep.subr.mxu0 0.0
    %207 = vmatpush1.msra.mxu0 0.0
    %208 = vmatprep.subr.mxu0 0.0
    %209 = vmatpush1.msra.mxu0 0.0
    %210 = vmatprep.subr.mxu0 0.0
    %211 = vmatpush1.msra.mxu0 0.0
    %212 = vmatprep.subr.mxu0 0.0
    %213 = vmatpush1.msra.mxu0 0.0
    %214 = vmatprep.subr.mxu0 0.0
    %215 = vmatpush1.msra.mxu0 0.0
    %216 = vmatprep.subr.mxu0 0.0
    %217 = vmatpush1.msra.mxu0 0.0
    %218 = vmatprep.subr.mxu0 0.0
    %219 = vmatpush1.msra.mxu0 0.0
    %220 = vmatprep.subr.mxu0 0.0
    %221 = vmatpush1.msra.mxu0 0.0
    %222 = vmatprep.subr.mxu0 0.0
    %223 = vmatpush1.msra.mxu0 0.0
    %224 = vmatprep.subr.mxu0 0.0
    %225 = vmatpush1.msra.mxu0 0.0
    %226 = vmatprep.subr.mxu0 0.0
    %227 = vmatpush1.msra.mxu0 0.0
    %228 = vmatprep.subr.mxu0 0.0
    %229 = vmatpush1.msra.mxu0 0.0
    %230 = vmatprep.subr.mxu0 0.0
    %231 = vmatpush1.msra.mxu0 0.0
    %232 = vmatprep.subr.mxu0 0.0
    %233 = vmatpush1.msra.mxu0 0.0
    %234 = vmatprep.mubr.f32.mxu0 0.0
    %235 = vmatmul.mubr.f32.gmra.mrb[0].mxu0 %v161
    %v236 = vpop.f32.mrb[0].mxu0
    %v237 = vadd.f32 %v152, %v236
    %v238 = vpop.f32.mrb[0].mxu0
    %239 = vmatprep.mubr.f32.mxu0 0.0
    %240 = vmatmul.mubr.f32.gmra.mrb[0].mxu0 %v164
    %v241 = vpop.f32.mrb[0].mxu0
    %v242 = vadd.f32 %v157, %v241
    %v243 = vpop.f32.mrb[0].mxu0
    %244 = vdwg.mxu0
    %v245 = vmax.f32 %v237, 0.0
    %v246 = vmax.f32 %v242, 0.0
    %248 = vset.pattern.permute.xlu0 0
    %249 = vperm.xlu0 %248, %v51
    %v250 = vpop.permute.xlu0 %249
    %v252 = vlaneseq
    %v253 = vshrl.u32 %v252, 7
    %v254 = vsub.s32 0, %v253
    %v255 = vrot.slane %v250, %v254
    %v257 = vsel %vm159, %v50, 0
    %v260 = vsel %vm166, %v246, 0
    %262 = vmatprep.subr.mxu0 0.0
    %263 = vmatpush1.msra.mxu0 %v245
    %264 = vmatprep.subr.mxu0 0.0
    %265 = vmatpush1.msra.mxu0 %v260
    %266 = vmatprep.subr.mxu0 0.0
    %267 = vmatpush1.msra.mxu0 0.0
    %268 = vmatprep.subr.mxu0 0.0
    %269 = vmatpush1.msra.mxu0 0.0
    %270 = vmatprep.subr.mxu0 0.0
    %271 = vmatpush1.msra.mxu0 0.0
    %272 = vmatprep.subr.mxu0 0.0
    %273 = vmatpush1.msra.mxu0 0.0
    %274 = vmatprep.subr.mxu0 0.0
    %275 = vmatpush1.msra.mxu0 0.0
    %276 = vmatprep.subr.mxu0 0.0
    %277 = vmatpush1.msra.mxu0 0.0
    %278 = vmatprep.subr.mxu0 0.0
    %279 = vmatpush1.msra.mxu0 0.0
    %280 = vmatprep.subr.mxu0 0.0
    %281 = vmatpush1.msra.mxu0 0.0
    %282 = vmatprep.subr.mxu0 0.0
    %283 = vmatpush1.msra.mxu0 0.0
    %284 = vmatprep.subr.mxu0 0.0
    %285 = vmatpush1.msra.mxu0 0.0
    %286 = vmatprep.subr.mxu0 0.0
    %287 = vmatpush1.msra.mxu0 0.0
    %288 = vmatprep.subr.mxu0 0.0
    %289 = vmatpush1.msra.mxu0 0.0
    %290 = vmatprep.subr.mxu0 0.0
    %291 = vmatpush1.msra.mxu0 0.0
    %292 = vmatprep.subr.mxu0 0.0
    %293 = vmatpush1.msra.mxu0 0.0
    %294 = vmatprep.subr.mxu0 0.0
    %295 = vmatpush1.msra.mxu0 0.0
    %296 = vmatprep.subr.mxu0 0.0
    %297 = vmatpush1.msra.mxu0 0.0
    %298 = vmatprep.subr.mxu0 0.0
    %299 = vmatpush1.msra.mxu0 0.0
    %300 = vmatprep.subr.mxu0 0.0
    %301 = vmatpush1.msra.mxu0 0.0
    %302 = vmatprep.subr.mxu0 0.0
    %303 = vmatpush1.msra.mxu0 0.0
    %304 = vmatprep.subr.mxu0 0.0
    %305 = vmatpush1.msra.mxu0 0.0
    %306 = vmatprep.subr.mxu0 0.0
    %307 = vmatpush1.msra.mxu0 0.0
    %308 = vmatprep.subr.mxu0 0.0
    %309 = vmatpush1.msra.mxu0 0.0
    %310 = vmatprep.subr.mxu0 0.0
    %311 = vmatpush1.msra.mxu0 0.0
    %312 = vmatprep.subr.mxu0 0.0
    %313 = vmatpush1.msra.mxu0 0.0
    %314 = vmatprep.subr.mxu0 0.0
    %315 = vmatpush1.msra.mxu0 0.0
    %316 = vmatprep.subr.mxu0 0.0
    %317 = vmatpush1.msra.mxu0 0.0
    %318 = vmatprep.subr.mxu0 0.0
    %319 = vmatpush1.msra.mxu0 0.0
    %320 = vmatprep.subr.mxu0 0.0
    %321 = vmatpush1.msra.mxu0 0.0
    %322 = vmatprep.subr.mxu0 0.0
    %323 = vmatpush1.msra.mxu0 0.0
    %324 = vmatprep.subr.mxu0 0.0
    %325 = vmatpush1.msra.mxu0 0.0
    %326 = vmatprep.mubr.f32.mxu0 0.0
    %327 = vmatmul.mubr.f32.gmra.mrb[0].mxu0 %v257
    %v328 = vpop.f32.mrb[0].mxu0
    %v329 = vadd.f32 %v255, %v328
    %v330 = vpop.f32.mrb[0].mxu0
    %331 = vdwg.mxu0
    %vm332 = vcmask 57344
    %333 = vst.msk [vmem:[#allocation6] sm:$0x1] %vm332, %v329
    // Predicated region
    $region34: #{tpu_custom_call.1} parent=1 // pred_check
      _
    $region35: #{tpu_custom_call.1} parent=1 // pred_check_branch
      %335 = sbr.rel (0) target = $region37
    $region36: #{tpu_custom_call.1} parent=1 // pred_region
      %s337 = ssub.s32 16, 16
      %338 = vsyncadd [#allocation5], %s337
      %s340 = sshll.u32 [#allocation6], 4
      %s341 = int_to_ptr.vmem [resolvable:$true] %s340
      %343 = dma.vmem_to_hbm [thread:$0]  %s341, 16, %s7, [#allocation5]
    $region37: #{tpu_custom_call.1} parent=1 // pred_fallthru
      _
    // Predicated region
    $region38: #{tpu_custom_call.1} parent=1 // pred_check
      _
    $region39: #{tpu_custom_call.1} parent=1 // pred_check_branch
      %345 = sbr.rel (0) target = $region41
    $region40: #{tpu_custom_call.1} parent=1 // pred_region
      %346 = dma.done [#allocation5], 16
    $region41: #{tpu_custom_call.1} parent=1 // pred_fallthru
      _
    %347 = vsyncpa [#allocation4], 1
    %348 = vsyncpa [#allocation5], 1

</llo_original>
